<compile_context>
chip_gen: v7x
topology: tpu7x:2x2x1
jax: 0.10.0
libtpu: 0.0.40
codegen_flags: <defaults>
</compile_context>

<pallas_src>
import jax
import jax.numpy as jnp
from jax.experimental import pallas as pl
from jax.experimental.pallas import tpu as pltpu

IN_CHANNELS = 3
KH = KW = 3
_TH_CAP = 256  # max output rows per H-tile (multiple of 8)


def make_sobel_kernel(in_ch: int) -> jnp.ndarray:
    """Mirrors SobelFilter.make_kernel: (2, in_ch, 3, 3). Used only for the reference."""
    sobel = jnp.array([[1.0, 0.0, -1.0],
                       [2.0, 0.0, -2.0],
                       [1.0, 0.0, -1.0]], dtype=jnp.float32)
    sobel_x = jnp.stack([sobel] * in_ch, axis=0)
    sobel_y = jnp.stack([sobel.T] * in_ch, axis=0)
    return jnp.stack([sobel_x, sobel_y], axis=0)


def _sobel_kernel(x_ref, mag_ref, gx_ref, gy_ref):
    """One (batch n, H-tile h) step.

    x_ref  : VMEM [1, C, Hp, W]   full (padded) image of batch item n, resident across h
    mag_ref: VMEM [1, 1, TH, WB]  sqrt(gx^2 + gy^2)
    gx_ref : VMEM [1, TH, WB]     conv output channel 0
    gy_ref : VMEM [1, TH, WB]     conv output channel 1
    WB == W  (lane-dense path, W % 128 == 0, last 2 cols junk) or W-2 (exact path).
    """
    _, C, Hp, W = x_ref.shape
    TH = mag_ref.shape[2]
    WB = mag_ref.shape[3]
    Wo = W - KW + 1

    # Row window of this H-tile: TH output rows need TH + 2 input rows (halo).
    if TH + 2 == Hp:                      # single H-tile -> whole (padded) image
        rows = slice(None)
    else:                                 # TH is a multiple of 8 in this branch
        rows = pl.ds(pl.multiple_of(pl.program_id(1) * TH, 8), TH + 2)

    # Channel sum first: the filter is replicated per channel, so
    # conv over C channels == conv of the channel-sum with one 3x3 filter.
    xs = x_ref[0, 0, rows, :].astype(jnp.float32)
    for c in range(1, C):
        xs = xs + x_ref[0, c, rows, :].astype(jnp.float32)   # (TH+2, W), f32

    # Vertical (sublane) part of the separable filters — constants folded:
    #   vsm = [1,2,1]^T smoothing   (feeds gx),  vdf = [1,0,-1]^T diff (feeds gy)
    top = xs[:TH, :]
    mid = xs[1:TH + 1, :]
    bot = xs[2:TH + 2, :]
    vsm = top + (mid + mid) + bot
    vdf = top - bot

    # Horizontal (lane) part.
    if WB == W:
        # Lane-dense path: column shifts via XLU roll (wrapped values land in the
        # 2 trailing columns, which the wrapper trims).
        vsm2 = pltpu.roll(vsm, shift=W - 2, axis=-1)   # vsm[:, j+2]
        vdf1 = pltpu.roll(vdf, shift=W - 1, axis=-1)   # vdf[:, j+1]
        vdf2 = pltpu.roll(vdf, shift=W - 2, axis=-1)   # vdf[:, j+2]
        gx = vsm - vsm2                                # [1, 0, -1]
        gy = vdf + (vdf1 + vdf1) + vdf2                # [1, 2, 1]
    else:
        # Exact-width path (small / unaligned W): only 3 lane-offset value slices.
        vdf1 = vdf[:, 1:Wo + 1]
        gx = vsm[:, :Wo] - vsm[:, 2:]
        gy = vdf[:, :Wo] + (vdf1 + vdf1) + vdf[:, 2:]

    gx_ref[0, :, :] = gx
    gy_ref[0, :, :] = gy
    mag_ref[0, 0, :, :] = jnp.sqrt(gx * gx + gy * gy)


def sobel_filter(x: jnp.ndarray, angles: bool = True, in_channels: int = IN_CHANNELS):
    N, C, H, W = x.shape
    assert C == in_channels
    assert H >= KH and W >= KW
    Ho, Wo = H - KH + 1, W - KW + 1

    # H tiling (2-row halo handled with pl.ds in-kernel on the resident image).
    if Ho <= _TH_CAP:
        TH, nH = Ho, 1
    else:
        TH = _TH_CAP
        nH = pl.cdiv(Ho, TH)
    Hop = nH * TH            # padded number of output rows
    Hp = Hop + 2             # input rows the kernel reads
    if Hp != H:
        x = jnp.pad(x, ((0, 0), (0, 0), (0, Hp - H), (0, 0)))

    # Lane-dense (full-W) output slabs when W is 128-aligned, exact Wo otherwise.
    WB = W if (W % 128 == 0) else Wo

    mag_p, gx_p, gy_p = pl.pallas_call(
        _sobel_kernel,
        grid=(N, nH),
        out_shape=(
            jax.ShapeDtypeStruct((N, 1, Hop, WB), jnp.float32),
            jax.ShapeDtypeStruct((N, Hop, WB), jnp.float32),
            jax.ShapeDtypeStruct((N, Hop, WB), jnp.float32),
        ),
        in_specs=[
            # Full image per batch item; block index ignores h -> stays resident
            # in VMEM across the H-tile axis (DMA'd once per n).
            pl.BlockSpec((1, C, Hp, W), lambda n, h: (n, 0, 0, 0)),
        ],
        out_specs=(
            pl.BlockSpec((1, 1, TH, WB), lambda n, h: (n, 0, h, 0)),
            pl.BlockSpec((1, TH, WB), lambda n, h: (n, h, 0)),
            pl.BlockSpec((1, TH, WB), lambda n, h: (n, h, 0)),
        ),
        compiler_params=pltpu.CompilerParams(
            dimension_semantics=("parallel", "arbitrary"),
            vmem_limit_bytes=32 * 1024 * 1024,
        ),
    )(x)

    mag = mag_p[:, :, :Ho, :Wo]
    if angles:
        # Mirrors the module exactly: torch.atan2(sobel_xy[1], sobel_xy[0]) indexes
        # the *batch* dimension (requires N >= 2) -> angle shape (2, Ho, Wo).
        # TODO(synk): atan2 has no clean Pallas/Mosaic TPU lowering; computed in
        # plain JAX on the small gx/gy slabs of batch items 0 and 1.
        gx01 = gx_p[:2, :Ho, :Wo]
        gy01 = gy_p[:2, :Ho, :Wo]
        angle = jnp.stack(
            [jnp.arctan2(gx01[1], gx01[0]), jnp.arctan2(gy01[1], gy01[0])],
            axis=0,
        )
        return mag, angle
    return mag


if __name__ == "__main__":
    key = jax.random.PRNGKey(0)
    x = jax.random.normal(key, (2, IN_CHANNELS, 16, 16), dtype=jnp.float32)

    mag, angle = sobel_filter(x, angles=True)
    jax.block_until_ready((mag, angle))

    # Plain-JAX reference of the PyTorch forward for a sanity check.
    k = make_sobel_kernel(IN_CHANNELS)
    ref_sxy = jax.lax.conv_general_dilated(
        x, k, window_strides=(1, 1), padding="VALID",
        dimension_numbers=("NCHW", "OIHW", "NCHW"))
    ref_mag = jnp.sqrt(jnp.sum(ref_sxy ** 2, axis=1, keepdims=True))
    ref_ang = jnp.arctan2(ref_sxy[1], ref_sxy[0])

    assert mag.shape == (2, 1, 14, 14) and angle.shape == (2, 14, 14)
    assert jnp.allclose(mag, ref_mag, atol=1e-4, rtol=1e-4)
    assert jnp.allclose(angle, ref_ang, atol=1e-3, rtol=1e-3)
    print("KERNEL_OK")
</pallas_src>

<mosaic_0001>
module attributes {stable_mosaic.version = 11 : i64} {
  func.func @_sobel_kernel(%arg0: i32, %arg1: i32, %arg2: memref<1x3x16x16xf32, #tpu.memory_space<vmem>>, %arg3: memref<1x1x14x14xf32, #tpu.memory_space<vmem>>, %arg4: memref<1x14x14xf32, #tpu.memory_space<vmem>>, %arg5: memref<1x14x14xf32, #tpu.memory_space<vmem>>) attributes {dimension_semantics = [#tpu.dimension_semantics<parallel>, #tpu.dimension_semantics<arbitrary>], iteration_bounds = array<i64: 2, 1>, scalar_prefetch = 0 : i64, scratch_operands = 0 : i64, tpu.core_type = #tpu.core_type<tc>, window_params = [{transform_indices = @transform_0, window_bounds = array<i64: 1, 3, 16, 16>}, {transform_indices = @transform_1, window_bounds = array<i64: 1, 1, 14, 14>}, {transform_indices = @transform_2, window_bounds = array<i64: 1, 14, 14>}, {transform_indices = @transform_3, window_bounds = array<i64: 1, 14, 14>}]} {
    %c0 = arith.constant 0 : index
    %c0_0 = arith.constant 0 : index
    %c0_1 = arith.constant 0 : index
    %c0_2 = arith.constant 0 : index
    %0 = vector.load %arg2[%c0, %c0_0, %c0_1, %c0_2] : memref<1x3x16x16xf32, #tpu.memory_space<vmem>>, vector<1x1x16x16xf32>
    %1 = vector.shape_cast %0 : vector<1x1x16x16xf32> to vector<16x16xf32>
    %c0_3 = arith.constant 0 : index
    %c1 = arith.constant 1 : index
    %c0_4 = arith.constant 0 : index
    %c0_5 = arith.constant 0 : index
    %2 = vector.load %arg2[%c0_3, %c1, %c0_4, %c0_5] : memref<1x3x16x16xf32, #tpu.memory_space<vmem>>, vector<1x1x16x16xf32>
    %3 = vector.shape_cast %2 : vector<1x1x16x16xf32> to vector<16x16xf32>
    %4 = arith.addf %1, %3 : vector<16x16xf32>
    %c0_6 = arith.constant 0 : index
    %c2 = arith.constant 2 : index
    %c0_7 = arith.constant 0 : index
    %c0_8 = arith.constant 0 : index
    %5 = vector.load %arg2[%c0_6, %c2, %c0_7, %c0_8] : memref<1x3x16x16xf32, #tpu.memory_space<vmem>>, vector<1x1x16x16xf32>
    %6 = vector.shape_cast %5 : vector<1x1x16x16xf32> to vector<16x16xf32>
    %7 = arith.addf %4, %6 : vector<16x16xf32>
    %8 = vector.extract_strided_slice %7 {offsets = [0, 0], sizes = [14, 16], strides = [1, 1]} : vector<16x16xf32> to vector<14x16xf32>
    %9 = vector.extract_strided_slice %7 {offsets = [1, 0], sizes = [14, 16], strides = [1, 1]} : vector<16x16xf32> to vector<14x16xf32>
    %10 = vector.extract_strided_slice %7 {offsets = [2, 0], sizes = [14, 16], strides = [1, 1]} : vector<16x16xf32> to vector<14x16xf32>
    %11 = arith.addf %9, %9 : vector<14x16xf32>
    %12 = arith.addf %8, %11 : vector<14x16xf32>
    %13 = arith.addf %12, %10 : vector<14x16xf32>
    %14 = arith.subf %8, %10 : vector<14x16xf32>
    %15 = vector.extract_strided_slice %14 {offsets = [0, 1], sizes = [14, 14], strides = [1, 1]} : vector<14x16xf32> to vector<14x14xf32>
    %16 = vector.extract_strided_slice %13 {offsets = [0, 0], sizes = [14, 14], strides = [1, 1]} : vector<14x16xf32> to vector<14x14xf32>
    %17 = vector.extract_strided_slice %13 {offsets = [0, 2], sizes = [14, 14], strides = [1, 1]} : vector<14x16xf32> to vector<14x14xf32>
    %18 = arith.subf %16, %17 : vector<14x14xf32>
    %19 = vector.extract_strided_slice %14 {offsets = [0, 0], sizes = [14, 14], strides = [1, 1]} : vector<14x16xf32> to vector<14x14xf32>
    %20 = arith.addf %15, %15 : vector<14x14xf32>
    %21 = arith.addf %19, %20 : vector<14x14xf32>
    %22 = vector.extract_strided_slice %14 {offsets = [0, 2], sizes = [14, 14], strides = [1, 1]} : vector<14x16xf32> to vector<14x14xf32>
    %23 = arith.addf %21, %22 : vector<14x14xf32>
    %c0_9 = arith.constant 0 : index
    %c0_10 = arith.constant 0 : index
    %c0_11 = arith.constant 0 : index
    %24 = vector.load %arg4[%c0_9, %c0_10, %c0_11] : memref<1x14x14xf32, #tpu.memory_space<vmem>>, vector<1x14x14xf32>
    %25 = vector.shape_cast %24 : vector<1x14x14xf32> to vector<14x14xf32>
    %26 = vector.shape_cast %18 : vector<14x14xf32> to vector<1x14x14xf32>
    tpu.vector_store %arg4[%c0_9, %c0_10, %c0_11], %26 {strides = array<i32>} : memref<1x14x14xf32, #tpu.memory_space<vmem>>, vector<1x14x14xf32>,
    %c0_12 = arith.constant 0 : index
    %c0_13 = arith.constant 0 : index
    %c0_14 = arith.constant 0 : index
    %27 = vector.load %arg5[%c0_12, %c0_13, %c0_14] : memref<1x14x14xf32, #tpu.memory_space<vmem>>, vector<1x14x14xf32>
    %28 = vector.shape_cast %27 : vector<1x14x14xf32> to vector<14x14xf32>
    %29 = vector.shape_cast %23 : vector<14x14xf32> to vector<1x14x14xf32>
    tpu.vector_store %arg5[%c0_12, %c0_13, %c0_14], %29 {strides = array<i32>} : memref<1x14x14xf32, #tpu.memory_space<vmem>>, vector<1x14x14xf32>,
    %30 = arith.mulf %18, %18 : vector<14x14xf32>
    %31 = arith.mulf %23, %23 : vector<14x14xf32>
    %32 = arith.addf %30, %31 : vector<14x14xf32>
    %33 = math.sqrt %32 : vector<14x14xf32>
    %c0_15 = arith.constant 0 : index
    %c0_16 = arith.constant 0 : index
    %c0_17 = arith.constant 0 : index
    %c0_18 = arith.constant 0 : index
    %34 = vector.load %arg3[%c0_15, %c0_16, %c0_17, %c0_18] : memref<1x1x14x14xf32, #tpu.memory_space<vmem>>, vector<1x1x14x14xf32>
    %35 = vector.shape_cast %34 : vector<1x1x14x14xf32> to vector<14x14xf32>
    %36 = vector.shape_cast %33 : vector<14x14xf32> to vector<1x1x14x14xf32>
    tpu.vector_store %arg3[%c0_15, %c0_16, %c0_17, %c0_18], %36 {strides = array<i32>} : memref<1x1x14x14xf32, #tpu.memory_space<vmem>>, vector<1x1x14x14xf32>,
    return
  }
  func.func @transform_0(%arg0: i32, %arg1: i32) -> (i32, i32, i32, i32) {
    %c0_i32 = arith.constant 0 : i32
    %c0_i32_0 = arith.constant 0 : i32
    %c0_i32_1 = arith.constant 0 : i32
    %c0_i32_2 = arith.constant 0 : i32
    return %arg0, %c0_i32, %c0_i32_0, %c0_i32_1 : i32, i32, i32, i32
  }
  func.func @transform_1(%arg0: i32, %arg1: i32) -> (i32, i32, i32, i32) {
    %c0_i32 = arith.constant 0 : i32
    %c0_i32_0 = arith.constant 0 : i32
    %c0_i32_1 = arith.constant 0 : i32
    return %arg0, %c0_i32, %arg1, %c0_i32_0 : i32, i32, i32, i32
  }
  func.func @transform_2(%arg0: i32, %arg1: i32) -> (i32, i32, i32) {
    %c0_i32 = arith.constant 0 : i32
    %c0_i32_0 = arith.constant 0 : i32
    return %arg0, %arg1, %c0_i32 : i32, i32, i32
  }
  func.func @transform_3(%arg0: i32, %arg1: i32) -> (i32, i32, i32) {
    %c0_i32 = arith.constant 0 : i32
    %c0_i32_0 = arith.constant 0 : i32
    return %arg0, %arg1, %c0_i32 : i32, i32, i32
  }
}

</mosaic_0001>

<llo_original>
// kernel: tpu_custom_call.1
$region0: #{tpu_custom_call.1}
  #allocation0 [shape = 'u32[]', space=smem, size = 0x4, offset = 0x4, fixed_abs, tag = 'smem constant byte address 0x4 - core index']
  #allocation1 [shape = 'u32[144,128]{1,0:T(1,128)}', space=vmem, size = 0x12000, scoped, tag = 'internal scratch']
  %s0 = inlined_call_operand.hbm [shape: f32[2,3,16,16], index: 0, kind: input, shape index: {}]
  %s1 = inlined_call_operand.vmem [shape: f32[2,1,14,14], index: 1, kind: output, shape index: {0}]
  %s2 = inlined_call_operand.vmem [shape: f32[2,14,14], index: 2, kind: output, shape index: {1}]
  %s3 = inlined_call_operand.vmem [shape: f32[2,14,14], index: 3, kind: output, shape index: {2}]
  %4 = xla_tuple %s1, %s2, %s3
  %s5 = sld [smem:[#allocation0]]
  $region57: #{tpu_custom_call.1} parent=0
    _
  %s7 = ssub.s32 1, %s5
  %s8 = scalar_select 0, %s7, %s5
  $region1: #{tpu_custom_call.1} parent=0
    #allocation2 [shape = 'u8[49152]{0}', space=vmem, size = 0xc000, scoped, tag = 'input window, operand 0']
    #allocation3 [shape = 's32[2]{0}', space=sflag, size = 0x8, scoped, tag = 'scoped memory for tpu_custom_call.1']
    %9 = vsyncpa [#allocation3], 0
    %s10 = scalar_lea.sflag [#allocation3], 1
    %11 = vsyncpa %s10, 0
    loop: start=0, step=1, limit=4
    $region2: #{tpu_custom_call.1} parent=1 // loop_pre_header
      _
    $region3: #{tpu_custom_call.1} parent=1 // loop_header
      %s13 = sphi 0, %s17
      %p14 = scmp.ge.s32.totalorder %s13, 4
      %s20 = sphi 0, %s32
      %s21 = sphi 0, %s28
      %s22 = sphi 0, %s20
      %s23 = sphi 0, %s21
      %s24 = sphi 0, %s22
      %s25 = sphi 0, %s23
      %s35 = sphi 0, %s37
      %s38 = sphi 0, %s35
      %s39 = sphi 0, %s38
      %s55 = sphi 0, %s39
      %s63 = sphi 0, %s65
      %s66 = sphi 0, %s63
      %s67 = sphi 0, %s66
      %s83 = sphi 0, %s67
      %s91 = sphi 0, %s93
      %s94 = sphi 0, %s91
      %s95 = sphi 0, %s94
      %s111 = sphi 0, %s95
      %s119 = sphi 0, %s121
      %s122 = sphi 0, %s119
      %s123 = sphi 0, %s122
      %s139 = sphi 0, %s123
    $region4: #{tpu_custom_call.1} parent=1 // loop_header_branch
      %16 = sbr.rel (%p14) target = $region8
    $region5: #{tpu_custom_call.1} parent=1 // loop_body
      %s18 = ssub.s32 %s13, 1
      %s19 = ssub.s32 %s13, 2
      %s26 = sadd.s32 1, %s21
      %p27 = scmp.ge.s32.totalorder %s26, 1
      %s28 = scalar_select %p27, 0, %s26
      %s29 = sadd.s32 1, %s20
      %s30 = scalar_select %p27, %s29, %s20
      %p31 = scmp.ge.s32.totalorder %s30, 2
      %s32 = scalar_select %p31, 0, %s30
      %s33 = ssub.s32 %s20, %s32
      %p34 = scmp.eq.s32.totalorder %s33, 0
      %s36 = sadd.s32 %s35, 1
      %s37 = scalar_select %p34, %s35, %s36
      %p40 = pneg %p34
      %p41 = scmp.eq.s32.totalorder %s13, 1
      %p42 = por %p40, %p41
      %p43 = scmp.ne.s32.totalorder %s35, %s38
      %p44 = scmp.eq.s32.totalorder %s13, 0
      %p45 = por %p43, %p44
      %p46 = scmp.ne.s32.totalorder %s35, %s38
      %p47 = scmp.eq.s32.totalorder %s18, 1
      %p48 = por %p46, %p47
      %p49 = scmp.ne.s32.totalorder %s38, %s39
      %p50 = scmp.eq.s32.totalorder %s18, 0
      %p51 = por %p49, %p50
      %p52 = scmp.ne.s32.totalorder %s38, %s39
      %p53 = scmp.eq.s32.totalorder %s19, 1
      %p54 = por %p52, %p53
      %p56 = scmp.ne.s32.totalorder %s39, %s55
      %p57 = scmp.eq.s32.totalorder %s19, 0
      %p58 = por %p56, %p57
      %s59 = ssub.s32 %s20, %s32
      %s60 = ssub.s32 %s21, %s28
      %s61 = sor.u32 %s59, %s60
      %p62 = scmp.eq.s32.totalorder %s61, 0
      %s64 = sadd.s32 %s63, 1
      %s65 = scalar_select %p62, %s63, %s64
      %p68 = pneg %p62
      %p69 = scmp.eq.s32.totalorder %s13, 1
      %p70 = por %p68, %p69
      %p71 = scmp.ne.s32.totalorder %s63, %s66
      %p72 = scmp.eq.s32.totalorder %s13, 0
      %p73 = por %p71, %p72
      %p74 = scmp.ne.s32.totalorder %s63, %s66
      %p75 = scmp.eq.s32.totalorder %s18, 1
      %p76 = por %p74, %p75
      %p77 = scmp.ne.s32.totalorder %s66, %s67
      %p78 = scmp.eq.s32.totalorder %s18, 0
      %p79 = por %p77, %p78
      %p80 = scmp.ne.s32.totalorder %s66, %s67
      %p81 = scmp.eq.s32.totalorder %s19, 1
      %p82 = por %p80, %p81
      %p84 = scmp.ne.s32.totalorder %s67, %s83
      %p85 = scmp.eq.s32.totalorder %s19, 0
      %p86 = por %p84, %p85
      %s87 = ssub.s32 %s20, %s32
      %s88 = ssub.s32 %s21, %s28
      %s89 = sor.u32 %s87, %s88
      %p90 = scmp.eq.s32.totalorder %s89, 0
      %s92 = sadd.s32 %s91, 1
      %s93 = scalar_select %p90, %s91, %s92
      %p96 = pneg %p90
      %p97 = scmp.eq.s32.totalorder %s13, 1
      %p98 = por %p96, %p97
      %p99 = scmp.ne.s32.totalorder %s91, %s94
      %p100 = scmp.eq.s32.totalorder %s13, 0
      %p101 = por %p99, %p100
      %p102 = scmp.ne.s32.totalorder %s91, %s94
      %p103 = scmp.eq.s32.totalorder %s18, 1
      %p104 = por %p102, %p103
      %p105 = scmp.ne.s32.totalorder %s94, %s95
      %p106 = scmp.eq.s32.totalorder %s18, 0
      %p107 = por %p105, %p106
      %p108 = scmp.ne.s32.totalorder %s94, %s95
      %p109 = scmp.eq.s32.totalorder %s19, 1
      %p110 = por %p108, %p109
      %p112 = scmp.ne.s32.totalorder %s95, %s111
      %p113 = scmp.eq.s32.totalorder %s19, 0
      %p114 = por %p112, %p113
      %s115 = ssub.s32 %s20, %s32
      %s116 = ssub.s32 %s21, %s28
      %s117 = sor.u32 %s115, %s116
      %p118 = scmp.eq.s32.totalorder %s117, 0
      %s120 = sadd.s32 %s119, 1
      %s121 = scalar_select %p118, %s119, %s120
      %p124 = pneg %p118
      %p125 = scmp.eq.s32.totalorder %s13, 1
      %p126 = por %p124, %p125
      %p127 = scmp.ne.s32.totalorder %s119, %s122
      %p128 = scmp.eq.s32.totalorder %s13, 0
      %p129 = por %p127, %p128
      %p130 = scmp.ne.s32.totalorder %s119, %s122
      %p131 = scmp.eq.s32.totalorder %s18, 1
      %p132 = por %p130, %p131
      %p133 = scmp.ne.s32.totalorder %s122, %s123
      %p134 = scmp.eq.s32.totalorder %s18, 0
      %p135 = por %p133, %p134
      %p136 = scmp.ne.s32.totalorder %s122, %s123
      %p137 = scmp.eq.s32.totalorder %s19, 1
      %p138 = por %p136, %p137
      %p140 = scmp.ne.s32.totalorder %s123, %s139
      %p141 = scmp.eq.s32.totalorder %s19, 0
      %p142 = por %p140, %p141
      %p143 = scmp.le.s32.totalorder 1, %s13
      %p144 = scmp.lt.s32.totalorder %s13, 3
      %p145 = pnand %p143, %p144
      %p146 = pneg %p145
      // Predicated region
      $region9: #{tpu_custom_call.1} parent=5 // pred_check
        _
      $region10: #{tpu_custom_call.1} parent=5 // pred_check_branch
        %148 = sbr.rel (%p145) target = $region12
      $region11: #{tpu_custom_call.1} parent=5 // pred_region
        %s149 = ssub.s32 %s13, 1
      $region12: #{tpu_custom_call.1} parent=5 // pred_fallthru
        _
      %p150 = scmp.lt.s32.totalorder %s13, 2
      // Predicated region
      $region13: #{tpu_custom_call.1} parent=5 // pred_check
        %p151 = pneg %p150
      $region14: #{tpu_custom_call.1} parent=5 // pred_check_branch
        %153 = sbr.rel (%p151) target = $region16
      $region15: #{tpu_custom_call.1} parent=5 // pred_region
        // Predicated region
        $region17: #{tpu_custom_call.1} parent=15 // pred_check
          %p154 = pneg %p45
        $region18: #{tpu_custom_call.1} parent=15 // pred_check_branch
          %156 = sbr.rel (%p154) target = $region20
        $region19: #{tpu_custom_call.1} parent=15 // pred_region
          %s157 = sand.u32 %s35, 1
          %s158 = scalar_lea.sflag [#allocation3], %s157
          %s159 = sand.u32 %s35, 1
          %s160 = smul.addr %s159, 48
          %s161 = scalar_lea.vmem [#allocation2], %s160
          %s163 = ssub.s32 768, 768
          %164 = vsyncadd %s158, %s163
          %s165 = smul.addr %s20, 6
          %s166 = smul.addr %s165, 128
          %s167 = scalar_lea.hbm %s0, %s166
          %s168 = sshll.u32 %s161, 4
          %s169 = int_to_ptr.vmem [resolvable:$true] %s168
          %174 = dma.hbm_to_vmem [thread:$0]  %s167, 768, %s169, %s158, 128, 128, 8
        $region20: #{tpu_custom_call.1} parent=15 // pred_fallthru
          _
      $region16: #{tpu_custom_call.1} parent=5 // pred_fallthru
        _
      %p175 = scmp.le.s32.totalorder 1, %s13
      %p176 = scmp.lt.s32.totalorder %s13, 3
      %p177 = pnand %p175, %p176
      %p178 = pneg %p177
      // Predicated region
      $region21: #{tpu_custom_call.1} parent=5 // pred_check
        _
      $region22: #{tpu_custom_call.1} parent=5 // pred_check_branch
        %180 = sbr.rel (%p177) target = $region24
      $region23: #{tpu_custom_call.1} parent=5 // pred_region
        %s181 = ssub.s32 %s13, 1
        %s182 = sand.u32 %s38, 1
        %s183 = scalar_lea.sflag [#allocation3], %s182
        %s184 = sand.u32 %s38, 1
        %s185 = smul.addr %s184, 48
        %s186 = scalar_lea.vmem [#allocation2], %s185
        // Predicated region
        $region25: #{tpu_custom_call.1} parent=23 // pred_check
          %p187 = pneg %p51
        $region26: #{tpu_custom_call.1} parent=23 // pred_check_branch
          %189 = sbr.rel (%p187) target = $region28
        $region27: #{tpu_custom_call.1} parent=23 // pred_region
          %190 = dma.done %s183, 768
        $region28: #{tpu_custom_call.1} parent=23 // pred_fallthru
          _
        %s191 = sand.u32 %s38, 1
        %s192 = scalar_lea.sflag [#allocation3], %s191
        %s193 = sand.u32 %s38, 1
        %s194 = smul.addr %s193, 48
        %s195 = scalar_lea.vmem [#allocation2], %s194
        %p196 = pneg %p51
        %p197 = pneg %p48
        %p198 = pneg %p79
        %p199 = pneg %p76
        %s200 = smul.u32 2, %s23
        %p201 = scmp.lt.s32.totalorder %s22, 1
        %s202 = scalar_select %p201, %s22, 1
        %p203 = scmp.lt.s32.totalorder %s200, 1
        %s204 = scalar_select %p203, %s200, 1
        %s205 = smul.addr %s202, 2
        %s206 = sadd.s32 %s204, %s205
        %s207 = smul.addr %s206, 8
        %s208 = scalar_lea.vmem %s1, %s207
        %p209 = pneg %p107
        %p210 = pneg %p104
        %s211 = smul.u32 2, %s23
        %p212 = scmp.lt.s32.totalorder %s22, 1
        %s213 = scalar_select %p212, %s22, 1
        %p214 = scmp.lt.s32.totalorder %s211, 1
        %s215 = scalar_select %p214, %s211, 1
        %s216 = smul.addr %s213, 2
        %s217 = sadd.s32 %s215, %s216
        %s218 = smul.addr %s217, 8
        %s219 = scalar_lea.vmem %s2, %s218
        %p220 = pneg %p135
        %p221 = pneg %p132
        %s222 = smul.u32 2, %s23
        %p223 = scmp.lt.s32.totalorder %s22, 1
        %s224 = scalar_select %p223, %s22, 1
        %p225 = scmp.lt.s32.totalorder %s222, 1
        %s226 = scalar_select %p225, %s222, 1
        %s227 = smul.addr %s224, 2
        %s228 = sadd.s32 %s226, %s227
        %s229 = smul.addr %s228, 8
        %s230 = scalar_lea.vmem %s3, %s229
        %s231 = smul.u32 2, %s23
        %p232 = scmp.lt.s32.totalorder %s22, 1
        %s233 = scalar_select %p232, %s22, 1
        %p234 = scmp.lt.s32.totalorder %s231, 1
        %s235 = scalar_select %p234, %s231, 1
        %s236 = smul.addr %s233, 2
        %s237 = sadd.s32 %s235, %s236
        %s238 = smul.addr %s237, 8
        %s239 = scalar_lea.vmem %s1, %s238
        %s240 = smul.u32 2, %s23
        %s241 = smul.u32 2, %s23
        %p242 = scmp.lt.s32.totalorder %s22, 1
        %s243 = scalar_select %p242, %s22, 1
        %p244 = scmp.lt.s32.totalorder %s241, 1
        %s245 = scalar_select %p244, %s241, 1
        %s246 = smul.addr %s243, 2
        %s247 = sadd.s32 %s245, %s246
        %s248 = smul.addr %s247, 8
        %s249 = scalar_lea.vmem %s2, %s248
        %s250 = smul.u32 2, %s23
        %s251 = smul.u32 2, %s23
        %p252 = scmp.lt.s32.totalorder %s22, 1
        %s253 = scalar_select %p252, %s22, 1
        %p254 = scmp.lt.s32.totalorder %s251, 1
        %s255 = scalar_select %p254, %s251, 1
        %s256 = smul.addr %s253, 2
        %s257 = sadd.s32 %s255, %s256
        %s258 = smul.addr %s257, 8
        %s259 = scalar_lea.vmem %s3, %s258
        %s260 = smul.u32 2, %s23
        %v261 = vld [vmem:[%s186] sm:$0xff]
        %v262 = vld [vmem:[%s186 + $0x8] sm:$0xff]
        %s263 = scalar_lea.vmem %s186, 16 [#allocation2]
        %v264 = vld [vmem:[%s263] sm:$0xff]
        %v265 = vld [vmem:[%s263 + $0x8] sm:$0xff]
        %v266 = vadd.f32 %v261, %v264
        %v267 = vadd.f32 %v262, %v265
        %s268 = scalar_lea.vmem %s186, 32 [#allocation2]
        %v269 = vld [vmem:[%s268] sm:$0xff]
        %v270 = vld [vmem:[%s268 + $0x8] sm:$0xff]
        %v271 = vadd.f32 %v266, %v269
        %v272 = vadd.f32 %v267, %v270
        %v273 = vadd.f32 %v271, %v271
        %v274 = vadd.f32 %v272, %v272
        %vm277 = vcmask 1046528
        %v278 = vrot.slane %v273, 1
        %v279 = vrot.slane %v274, 1
        %v280 = vsel %vm277, %v278, %v279
        %v283 = vadd.f32 %v271, %v280
        %v284 = vadd.f32 %v272, %v279
        %vm287 = vcmask 1045504
        %v288 = vrot.slane %v271, 2
        %v289 = vrot.slane %v272, 2
        %v290 = vsel %vm287, %v288, %v289
        %v293 = vadd.f32 %v283, %v290
        %v294 = vadd.f32 %v284, %v289
        %v295 = vsub.f32 %v271, %v290
        %v296 = vsub.f32 %v272, %v289
        %299 = vrot.lane.b32.xlu0 %v293, 126
        %v300 = vpop.permute.xlu0 %299
        %301 = vrot.lane.b32.xlu0 %v294, 126
        %v302 = vpop.permute.xlu0 %301
        %v305 = vsub.f32 %v293, %v300
        %v306 = vsub.f32 %v294, %v302
        %v307 = vadd.f32 %v295, %v295
        %v308 = vadd.f32 %v296, %v296
        %311 = vrot.lane.b32.xlu0 %v307, 127
        %v312 = vpop.permute.xlu0 %311
        %313 = vrot.lane.b32.xlu0 %v308, 127
        %v314 = vpop.permute.xlu0 %313
        %v317 = vadd.f32 %v295, %v312
        %v318 = vadd.f32 %v296, %v314
        %321 = vrot.lane.b32.xlu0 %v295, 126
        %v322 = vpop.permute.xlu0 %321
        %323 = vrot.lane.b32.xlu0 %v296, 126
        %v324 = vpop.permute.xlu0 %323
        %v327 = vadd.f32 %v317, %v322
        %v328 = vadd.f32 %v318, %v324
        %vm329 = vcmask 113664
        %330 = vst.msk [vmem:[%s249] sm:$0xff] %vm329, %v305
        %vm331 = vcmask 111616
        %332 = vst.msk [vmem:[%s249 + $0x8] sm:$0x3f] %vm331, %v306
        %333 = vst.msk [vmem:[%s259] sm:$0xff] %vm329, %v327
        %334 = vst.msk [vmem:[%s259 + $0x8] sm:$0x3f] %vm331, %v328
        %v335 = vmul.f32 %v305, %v305
        %v336 = vmul.f32 %v306, %v306
        %v337 = vmul.f32 %v327, %v327
        %v338 = vmul.f32 %v328, %v328
        %v339 = vadd.f32 %v335, %v337
        %v340 = vadd.f32 %v336, %v338
        %v341 = vrsqrt.pop %v339
        %v342 = vmul.f32 %v339, %v341
        %vm343 = vcmp.eq.f32.partialorder %v339, inf
        %v344 = vsel %vm343, %v339, %v342
        %vm345 = vcmp.eq.f32.partialorder %v339, 0.0
        %v346 = vand.u32 %v339, 2147483648
        %v347 = vsel %vm345, %v346, %v344
        %v348 = vrsqrt.pop %v340
        %v349 = vmul.f32 %v340, %v348
        %vm350 = vcmp.eq.f32.partialorder %v340, inf
        %v351 = vsel %vm350, %v340, %v349
        %vm352 = vcmp.eq.f32.partialorder %v340, 0.0
        %v353 = vand.u32 %v340, 2147483648
        %v354 = vsel %vm352, %v353, %v351
        %355 = vst.msk [vmem:[%s239] sm:$0xff] %vm329, %v347
        %356 = vst.msk [vmem:[%s239 + $0x8] sm:$0x3f] %vm331, %v354
        %s357 = smul.u32 2, %s23
        %p358 = scmp.lt.s32.totalorder %s22, 1
        %s359 = scalar_select %p358, %s22, 1
        %p360 = scmp.lt.s32.totalorder %s357, 1
        %s361 = scalar_select %p360, %s357, 1
        %s362 = smul.addr %s359, 2
        %s363 = sadd.s32 %s361, %s362
        %s364 = smul.addr %s363, 8
        %s365 = scalar_lea.vmem %s1, %s364
        %s366 = smul.u32 2, %s23
        %p367 = scmp.lt.s32.totalorder %s22, 1
        %s368 = scalar_select %p367, %s22, 1
        %p369 = scmp.lt.s32.totalorder %s366, 1
        %s370 = scalar_select %p369, %s366, 1
        %s371 = smul.addr %s368, 2
        %s372 = sadd.s32 %s370, %s371
        %s373 = smul.addr %s372, 8
        %s374 = scalar_lea.vmem %s2, %s373
        %s375 = smul.u32 2, %s23
        %p376 = scmp.lt.s32.totalorder %s22, 1
        %s377 = scalar_select %p376, %s22, 1
        %p378 = scmp.lt.s32.totalorder %s375, 1
        %s379 = scalar_select %p378, %s375, 1
        %s380 = smul.addr %s377, 2
        %s381 = sadd.s32 %s379, %s380
        %s382 = smul.addr %s381, 8
        %s383 = scalar_lea.vmem %s3, %s382
        // Predicated region
        $region29: #{tpu_custom_call.1} parent=23 // pred_check
          %p384 = pneg %p76
        $region30: #{tpu_custom_call.1} parent=23 // pred_check_branch
          %386 = sbr.rel (%p384) target = $region32
        $region31: #{tpu_custom_call.1} parent=23 // pred_region
          %s387 = smul.u32 2, %s23
        $region32: #{tpu_custom_call.1} parent=23 // pred_fallthru
          _
        // Predicated region
        $region33: #{tpu_custom_call.1} parent=23 // pred_check
          %p388 = pneg %p104
        $region34: #{tpu_custom_call.1} parent=23 // pred_check_branch
          %390 = sbr.rel (%p388) target = $region36
        $region35: #{tpu_custom_call.1} parent=23 // pred_region
          %s391 = smul.u32 2, %s23
        $region36: #{tpu_custom_call.1} parent=23 // pred_fallthru
          _
        // Predicated region
        $region37: #{tpu_custom_call.1} parent=23 // pred_check
          %p392 = pneg %p132
        $region38: #{tpu_custom_call.1} parent=23 // pred_check_branch
          %394 = sbr.rel (%p392) target = $region40
        $region39: #{tpu_custom_call.1} parent=23 // pred_region
          %s395 = smul.u32 2, %s23
        $region40: #{tpu_custom_call.1} parent=23 // pred_fallthru
          _
      $region24: #{tpu_custom_call.1} parent=5 // pred_fallthru
        _
      %p396 = scmp.le.s32.totalorder 2, %s13
      // Predicated region
      $region41: #{tpu_custom_call.1} parent=5 // pred_check
        %p397 = pneg %p396
      $region42: #{tpu_custom_call.1} parent=5 // pred_check_branch
        %399 = sbr.rel (%p397) target = $region44
      $region43: #{tpu_custom_call.1} parent=5 // pred_region
        %s400 = ssub.s32 %s13, 2
        // Predicated region
        $region45: #{tpu_custom_call.1} parent=43 // pred_check
          %p401 = pneg %p82
        $region46: #{tpu_custom_call.1} parent=43 // pred_check_branch
          %403 = sbr.rel (%p401) target = $region48
        $region47: #{tpu_custom_call.1} parent=43 // pred_region
          %s404 = smul.u32 2, %s25
          %p405 = scmp.lt.s32.totalorder %s24, 1
          %s406 = scalar_select %p405, %s24, 1
          %p407 = scmp.lt.s32.totalorder %s404, 1
          %s408 = scalar_select %p407, %s404, 1
          %s409 = smul.addr %s406, 2
          %s410 = sadd.s32 %s408, %s409
          %s411 = smul.addr %s410, 8
          %s412 = scalar_lea.vmem %s1, %s411
        $region48: #{tpu_custom_call.1} parent=43 // pred_fallthru
          _
        // Predicated region
        $region49: #{tpu_custom_call.1} parent=43 // pred_check
          %p413 = pneg %p110
        $region50: #{tpu_custom_call.1} parent=43 // pred_check_branch
          %415 = sbr.rel (%p413) target = $region52
        $region51: #{tpu_custom_call.1} parent=43 // pred_region
          %s416 = smul.u32 2, %s25
          %p417 = scmp.lt.s32.totalorder %s24, 1
          %s418 = scalar_select %p417, %s24, 1
          %p419 = scmp.lt.s32.totalorder %s416, 1
          %s420 = scalar_select %p419, %s416, 1
          %s421 = smul.addr %s418, 2
          %s422 = sadd.s32 %s420, %s421
          %s423 = smul.addr %s422, 8
          %s424 = scalar_lea.vmem %s2, %s423
        $region52: #{tpu_custom_call.1} parent=43 // pred_fallthru
          _
        // Predicated region
        $region53: #{tpu_custom_call.1} parent=43 // pred_check
          %p425 = pneg %p138
        $region54: #{tpu_custom_call.1} parent=43 // pred_check_branch
          %427 = sbr.rel (%p425) target = $region56
        $region55: #{tpu_custom_call.1} parent=43 // pred_region
          %s428 = smul.u32 2, %s25
          %p429 = scmp.lt.s32.totalorder %s24, 1
          %s430 = scalar_select %p429, %s24, 1
          %p431 = scmp.lt.s32.totalorder %s428, 1
          %s432 = scalar_select %p431, %s428, 1
          %s433 = smul.addr %s430, 2
          %s434 = sadd.s32 %s432, %s433
          %s435 = smul.addr %s434, 8
          %s436 = scalar_lea.vmem %s3, %s435
        $region56: #{tpu_custom_call.1} parent=43 // pred_fallthru
          _
      $region44: #{tpu_custom_call.1} parent=5 // pred_fallthru
        _
    $region6: #{tpu_custom_call.1} parent=1 // loop_footer
      %s17 = sadd.s32 1, %s13
    $region7: #{tpu_custom_call.1} parent=1 // loop_footer_branch
      %12 = sbr.rel target = $region3
    $region8: #{tpu_custom_call.1} parent=1 // loop_exit
      _
    %437 = vsyncpa [#allocation3], 1
    %s438 = scalar_lea.sflag [#allocation3], 1
    %439 = vsyncpa %s438, 1

</llo_original>
